<compile_context>
chip_gen: v7x
topology: tpu7x:2x2x1
jax: 0.10.0
libtpu: 0.0.40
codegen_flags: <defaults>
</compile_context>

<pallas_src>
import functools

import jax
import jax.numpy as jnp
from jax.experimental import pallas as pl
from jax.experimental.pallas import tpu as pltpu


def _numerical_embedder_kernel(x_ref, w_ref, b_ref, o_ref, *, n, d, cn, n_terms):
    # x_ref: (TB, N)    batch tile of raw numerical features
    # w_ref: (1, CN)    flattened weights chunk  (invariant over the batch axis)
    # b_ref: (1, CN)    flattened biases chunk
    # o_ref: (TB, CN)   lane-dense flattened output tile
    j = pl.program_id(1)                       # N*D-chunk index (0 when CN == N*D)
    x = x_ref[...].astype(jnp.float32)         # (TB, N)

    # Exact multi-term bf16 split of x (n_terms == 1 when bf16 accuracy suffices).
    parts = []
    r = x
    for _ in range(n_terms):
        p = r.astype(jnp.bfloat16).astype(jnp.float32)   # exact bf16 value, held in f32
        parts.append(p)
        r = r - p
    xs = parts[0] if n_terms == 1 else jnp.concatenate(parts, axis=-1)
    xs = xs.astype(jnp.bfloat16)               # (TB, n_terms*N), every entry bf16-exact

    # One-hot expansion matrix built in-kernel (no HBM constant, no extra DMA):
    #   E[k, c] = 1  iff  (k mod N) == (j*CN + c) // D
    # computed with iota / multiply / compares only (no integer div or mod).
    k = n_terms * n
    row = jax.lax.broadcasted_iota(jnp.int32, (k, cn), 0)
    col = jax.lax.broadcasted_iota(jnp.int32, (k, cn), 1) + j * cn
    feat = row
    for t in range(1, n_terms):                # feat = row mod n  (n_terms <= 3)
        feat = feat - jnp.where(row >= t * n, n, 0)
    e = ((feat * d <= col) & (col < feat * d + d)).astype(jnp.bfloat16)

    # Single DEFAULT-precision MXU pass.  E holds exact 0/1 bf16 values, the split
    # terms are exact bf16 and accumulation is f32, so for n_terms == 3 this
    # reproduces x_exp[b, n*D + d] == x[b, n] exactly -- pure layout plumbing.
    x_exp = jnp.dot(xs, e, preferred_element_type=jnp.float32)   # (TB, CN)

    out = x_exp * w_ref[...].astype(jnp.float32) + b_ref[...].astype(jnp.float32)
    o_ref[...] = out.astype(o_ref.dtype)


def _tpu_core_count():
    """TensorCores the Pallas grid is sharded over (megacore); default 1 (v5e/v6e)."""
    try:
        info = pltpu.get_tpu_info()
        for attr in ("num_cores", "core_count", "num_tensorcores",
                     "num_cores_per_chip", "tensorcores_per_chip"):
            v = getattr(info, attr, None)
            if v is not None and int(v) > 0:
                return int(v)
    except Exception:
        pass
    try:
        v = getattr(jax.devices()[0], "num_cores", None)
        if v is not None and int(v) > 0:
            return int(v)
    except Exception:
        pass
    return 1


def _tpu_vmem_bytes():
    try:
        v = getattr(pltpu.get_tpu_info(), "vmem_capacity_bytes", None)
        if v:
            return int(v)
    except Exception:
        pass
    return 64 << 20   # conservative default: v7x per-core VMEM


def _nd_chunking(nd, max_chunk=16384):
    """Chunk the flattened N*D axis only when it is very large (keeps blocks and
    resident weight/bias chunks a few MiB on v7x's 64 MiB VMEM)."""
    if nd <= max_chunk or nd % 128 != 0:
        return nd, 1
    cn = (max_chunk // 128) * 128
    while cn >= 128 and nd % cn != 0:
        cn -= 128
    if cn < 128:
        return nd, 1
    return cn, nd // cn


def _batch_tiling(batch, out_row_bytes, num_cores, target_tile_bytes):
    """Pick (tile_rows, padded_batch, num_tiles) for the batch grid axis."""
    if batch <= 8:
        # Single full-array block: no grid overhead, no padding; block dims equal
        # the array dims so the (8,128) rule is trivially satisfied.
        return batch, batch, 1
    target_rows = max(8, target_tile_bytes // max(out_row_bytes, 1))
    num_tiles = int(pl.cdiv(batch, target_rows))
    if num_cores > 1:
        # Megacore (v7x): make the tile count a multiple of the core count so
        # dimension_semantics=("parallel", ...) gives both TCs balanced work.
        num_tiles = -(-max(num_tiles, num_cores) // num_cores) * num_cores
    # Single-TC parts (v5e/v6e): never force a split -- largest tile that fits.
    tile_rows = -(-int(pl.cdiv(batch, num_tiles)) // 8) * 8   # sublane multiple of 8
    num_tiles = int(pl.cdiv(batch, tile_rows))                # drop pure-padding tiles
    return tile_rows, tile_rows * num_tiles, num_tiles


def numerical_embedder(x, weights, biases, *, out_dtype=None, exact=None,
                       target_tile_bytes=None):
    """x: (B, N); weights/biases: (N, D)  ->  x[:, :, None] * weights + biases."""
    batch, n = x.shape
    n2, d = weights.shape
    assert n == n2 and biases.shape == (n, d)
    # out_dtype=jnp.bfloat16 halves HBM writeback and drops the expansion to a
    # single bf16 MXU pass; the default keeps exact f32 module semantics.
    out_dtype = x.dtype if out_dtype is None else jnp.dtype(out_dtype)
    if exact is None:
        exact = jnp.dtype(out_dtype) == jnp.float32
    n_terms = 3 if (exact and jnp.dtype(x.dtype).itemsize >= 4) else 1

    nd = n * d
    cn, num_chunks = _nd_chunking(nd)

    num_cores = _tpu_core_count()
    vmem_cap = _tpu_vmem_bytes()
    budget = min(40 << 20, (vmem_cap * 3) // 5)     # scoped-VMEM cap we will request

    out_itemsize = jnp.dtype(out_dtype).itemsize
    out_row_bytes = cn * out_itemsize
    if target_tile_bytes is None:
        target_tile_bytes = min(4 << 20, budget // 8)   # ~2-4 MiB of output per step
    tb, padded, num_tiles = _batch_tiling(batch, out_row_bytes, num_cores,
                                          target_tile_bytes)

    x_in = x if padded == batch else jnp.pad(x, ((0, padded - batch), (0, 0)))
    w_flat = weights.reshape(1, nd)     # pure metadata reshape (row-major)
    b_flat = biases.reshape(1, nd)

    # VMEM budget: double-buffered pipelined blocks + the in-kernel f32/bf16
    # intermediates (x_exp, pre-cast out, split terms, E) + headroom.
    io_bytes = (2 * tb * n * x.dtype.itemsize             # x tile      (x2 buffers)
                + 2 * tb * cn * out_itemsize              # out tile    (x2 buffers)
                + 4 * cn * weights.dtype.itemsize)        # w + b chunk (x2 buffers)
    inter_bytes = (2 * tb * cn * 4                        # x_exp + pre-cast out (f32)
                   + (3 * n) * cn * 2                     # in-kernel E (bf16)
                   + (4 * n_terms + 2) * tb * n * 4)      # split terms / xs
    vmem_need = io_bytes + inter_bytes
    vmem_limit = int(min(budget, max(16 << 20, 2 * vmem_need)))
    vmem_limit = int(max(vmem_limit, vmem_need + vmem_need // 2))

    kernel = functools.partial(_numerical_embedder_kernel,
                               n=n, d=d, cn=cn, n_terms=n_terms)

    out_flat = pl.pallas_call(
        kernel,
        out_shape=jax.ShapeDtypeStruct((padded, nd), out_dtype),
        grid_spec=pltpu.PrefetchScalarGridSpec(
            num_scalar_prefetch=0,
            grid=(num_tiles, num_chunks),
            in_specs=[
                pl.BlockSpec((tb, n), lambda i, j: (i, 0)),   # batch tile of x
                pl.BlockSpec((1, cn), lambda i, j: (0, j)),   # weights chunk
                pl.BlockSpec((1, cn), lambda i, j: (0, j)),   # biases chunk
            ],
            out_specs=pl.BlockSpec((tb, cn), lambda i, j: (i, j)),  # lane-dense out
        ),
        compiler_params=pltpu.CompilerParams(
            # Batch tiles shard over TensorCores on megacore parts (v7x); on
            # single-TC v5e/v6e the grid is simply a sequential loop.
            dimension_semantics=("parallel", "arbitrary"),
            vmem_limit_bytes=vmem_limit,
        ),
    )(x_in, w_flat, b_flat)

    if padded != batch:
        # Padded rows hold bias values before this slice; never reuse the padded
        # HBM buffer downstream.
        out_flat = out_flat[:batch]
    return out_flat.reshape(batch, n, d)


if __name__ == "__main__":
    # Small shapes consistent with the module: dim=32, num_numerical_types=8, batch=2.
    B, N, D = 2, 8, 32

    key = jax.random.PRNGKey(0)
    k_x, k_w, k_b = jax.random.split(key, 3)

    x = jax.random.normal(k_x, (B, N), dtype=jnp.float32)
    weights = jax.random.normal(k_w, (N, D), dtype=jnp.float32)   # ~ torch.randn
    biases = jax.random.normal(k_b, (N, D), dtype=jnp.float32)    # ~ torch.randn

    out = jax.block_until_ready(numerical_embedder(x, weights, biases))
    ref = x[:, :, None] * weights[None, :, :] + biases[None, :, :]
    assert out.shape == (B, N, D)
    assert jnp.allclose(out, ref, atol=1e-4, rtol=1e-4), float(
        jnp.max(jnp.abs(out - ref)))

    # Exercise the batch-tiled multi-step path (padding + several grid steps) by
    # forcing a small output-tile target.
    B2 = 1003
    x2 = jax.random.normal(jax.random.PRNGKey(1), (B2, N), dtype=jnp.float32)
    out2 = jax.block_until_ready(
        numerical_embedder(x2, weights, biases, target_tile_bytes=64 << 10))
    ref2 = x2[:, :, None] * weights[None, :, :] + biases[None, :, :]
    assert out2.shape == (B2, N, D)
    assert jnp.allclose(out2, ref2, atol=1e-4, rtol=1e-4), float(
        jnp.max(jnp.abs(out2 - ref2)))

    # Exercise the bf16-output fast path (single-pass expansion, halved writeback).
    out3 = jax.block_until_ready(
        numerical_embedder(x2, weights, biases, out_dtype=jnp.bfloat16))
    assert out3.shape == (B2, N, D)
    assert jnp.allclose(out3.astype(jnp.float32), ref2, atol=6e-2, rtol=6e-2), float(
        jnp.max(jnp.abs(out3.astype(jnp.float32) - ref2)))

    print("KERNEL_OK")
</pallas_src>

<mosaic_0001>
module attributes {stable_mosaic.version = 11 : i64} {
  func.func @_numerical_embedder_kernel(%arg0: i32, %arg1: i32, %arg2: memref<2x8xf32, #tpu.memory_space<vmem>>, %arg3: memref<1x256xf32, #tpu.memory_space<vmem>>, %arg4: memref<1x256xf32, #tpu.memory_space<vmem>>, %arg5: memref<2x256xf32, #tpu.memory_space<vmem>>) attributes {dimension_semantics = [#tpu.dimension_semantics<parallel>, #tpu.dimension_semantics<arbitrary>], iteration_bounds = array<i64: 1, 1>, scalar_prefetch = 0 : i64, scratch_operands = 0 : i64, tpu.core_type = #tpu.core_type<tc>, window_params = [{transform_indices = @transform_0, window_bounds = array<i64: 2, 8>}, {transform_indices = @transform_1, window_bounds = array<i64: 1, 256>}, {transform_indices = @transform_2, window_bounds = array<i64: 1, 256>}, {transform_indices = @transform_3, window_bounds = array<i64: 2, 256>}]} {
    %c0 = arith.constant 0 : index
    %c0_0 = arith.constant 0 : index
    %0 = vector.load %arg2[%c0, %c0_0] : memref<2x8xf32, #tpu.memory_space<vmem>>, vector<2x8xf32>
    %1 = arith.truncf %0 : vector<2x8xf32> to vector<2x8xbf16>
    %2 = arith.extf %1 : vector<2x8xbf16> to vector<2x8xf32>
    %3 = arith.subf %0, %2 : vector<2x8xf32>
    %4 = arith.truncf %3 : vector<2x8xf32> to vector<2x8xbf16>
    %5 = arith.extf %4 : vector<2x8xbf16> to vector<2x8xf32>
    %6 = arith.subf %3, %5 : vector<2x8xf32>
    %7 = arith.truncf %6 : vector<2x8xf32> to vector<2x8xbf16>
    %8 = arith.extf %7 : vector<2x8xbf16> to vector<2x8xf32>
    %9 = tpu.concatenate %2, %5, %8 in 1 : vector<2x8xf32>, vector<2x8xf32>, vector<2x8xf32> -> vector<2x24xf32>
    %10 = arith.truncf %9 : vector<2x24xf32> to vector<2x24xbf16>
    %11 = tpu.iota {dimensions = array<i32: 0>} : vector<24x256xi32>
    %12 = tpu.iota {dimensions = array<i32: 1>} : vector<24x256xi32>
    %c256_i32 = arith.constant 256 : i32
    %13 = arith.muli %arg1, %c256_i32 : i32
    %14 = vector.broadcast %13 : i32 to vector<24x256xi32>
    %15 = arith.addi %12, %14 : vector<24x256xi32>
    %c8_i32 = arith.constant 8 : i32
    %16 = vector.broadcast %c8_i32 : i32 to vector<24x256xi32>
    %17 = arith.cmpi sge, %11, %16 : vector<24x256xi32>
    %c8_i32_1 = arith.constant 8 : i32
    %c0_i32 = arith.constant 0 : i32
    %18 = vector.broadcast %c8_i32_1 : i32 to vector<24x256xi32>
    %19 = vector.broadcast %c0_i32 : i32 to vector<24x256xi32>
    %20 = arith.select %17, %18, %19 : vector<24x256xi1>, vector<24x256xi32>
    %21 = arith.subi %11, %20 : vector<24x256xi32>
    %c16_i32 = arith.constant 16 : i32
    %22 = vector.broadcast %c16_i32 : i32 to vector<24x256xi32>
    %23 = arith.cmpi sge, %11, %22 : vector<24x256xi32>
    %c8_i32_2 = arith.constant 8 : i32
    %c0_i32_3 = arith.constant 0 : i32
    %24 = vector.broadcast %c8_i32_2 : i32 to vector<24x256xi32>
    %25 = vector.broadcast %c0_i32_3 : i32 to vector<24x256xi32>
    %26 = arith.select %23, %24, %25 : vector<24x256xi1>, vector<24x256xi32>
    %27 = arith.subi %21, %26 : vector<24x256xi32>
    %c32_i32 = arith.constant 32 : i32
    %28 = vector.broadcast %c32_i32 : i32 to vector<24x256xi32>
    %29 = arith.muli %27, %28 : vector<24x256xi32>
    %30 = arith.cmpi sle, %29, %15 : vector<24x256xi32>
    %c32_i32_4 = arith.constant 32 : i32
    %31 = vector.broadcast %c32_i32_4 : i32 to vector<24x256xi32>
    %32 = arith.muli %27, %31 : vector<24x256xi32>
    %c32_i32_5 = arith.constant 32 : i32
    %33 = vector.broadcast %c32_i32_5 : i32 to vector<24x256xi32>
    %34 = arith.addi %32, %33 : vector<24x256xi32>
    %35 = arith.cmpi slt, %15, %34 : vector<24x256xi32>
    %36 = arith.andi %30, %35 : vector<24x256xi1>
    %37 = arith.extui %36 : vector<24x256xi1> to vector<24x256xi32>
    %38 = arith.sitofp %37 : vector<24x256xi32> to vector<24x256xf32>
    %39 = arith.truncf %38 : vector<24x256xf32> to vector<24x256xbf16>
    %cst = arith.constant dense<0.000000e+00> : vector<2x256xf32>
    %40 = tpu.matmul %10, %39, %cst {dimension_numbers = #tpu.dot_dimension_numbers<[1], [0], [0], [1], [0, 0, 1, 1], [], []>} : vector<2x24xbf16>, vector<24x256xbf16>, vector<2x256xf32> -> vector<2x256xf32>
    %c0_6 = arith.constant 0 : index
    %c0_7 = arith.constant 0 : index
    %41 = vector.load %arg3[%c0_6, %c0_7] : memref<1x256xf32, #tpu.memory_space<vmem>>, vector<1x256xf32>
    %42 = vector.broadcast %41 : vector<1x256xf32> to vector<2x256xf32>
    %43 = arith.mulf %40, %42 : vector<2x256xf32>
    %c0_8 = arith.constant 0 : index
    %c0_9 = arith.constant 0 : index
    %44 = vector.load %arg4[%c0_8, %c0_9] : memref<1x256xf32, #tpu.memory_space<vmem>>, vector<1x256xf32>
    %45 = vector.broadcast %44 : vector<1x256xf32> to vector<2x256xf32>
    %46 = arith.addf %43, %45 : vector<2x256xf32>
    %c0_10 = arith.constant 0 : index
    %c0_11 = arith.constant 0 : index
    %47 = vector.load %arg5[%c0_10, %c0_11] : memref<2x256xf32, #tpu.memory_space<vmem>>, vector<2x256xf32>
    tpu.vector_store %arg5[%c0_10, %c0_11], %46 {strides = array<i32>} : memref<2x256xf32, #tpu.memory_space<vmem>>, vector<2x256xf32>,
    return
  }
  func.func @transform_0(%arg0: i32, %arg1: i32) -> (i32, i32) {
    %c0_i32 = arith.constant 0 : i32
    %c0_i32_0 = arith.constant 0 : i32
    return %arg0, %c0_i32 : i32, i32
  }
  func.func @transform_1(%arg0: i32, %arg1: i32) -> (i32, i32) {
    %c0_i32 = arith.constant 0 : i32
    %c0_i32_0 = arith.constant 0 : i32
    return %c0_i32, %arg1 : i32, i32
  }
  func.func @transform_2(%arg0: i32, %arg1: i32) -> (i32, i32) {
    %c0_i32 = arith.constant 0 : i32
    %c0_i32_0 = arith.constant 0 : i32
    return %c0_i32, %arg1 : i32, i32
  }
  func.func @transform_3(%arg0: i32, %arg1: i32) -> (i32, i32) {
    %c0_i32 = arith.constant 0 : i32
    return %arg0, %arg1 : i32, i32
  }
}

</mosaic_0001>

<llo_original>
// kernel: tpu_custom_call.1
$region0: #{tpu_custom_call.1}
  #allocation0 [shape = 'u32[]', space=smem, size = 0x4, offset = 0x4, fixed_abs, tag = 'smem constant byte address 0x4 - core index']
  #allocation1 [shape = 'u32[144,128]{1,0:T(1,128)}', space=vmem, size = 0x12000, scoped, tag = 'internal scratch']
  %s0 = inlined_call_operand.hbm [shape: f32[2,8], index: 0, kind: input, shape index: {}]
  %s1 = inlined_call_operand.vmem [shape: f32[1,256], index: 1, kind: input, shape index: {}]
  %s2 = inlined_call_operand.vmem [shape: f32[1,256], index: 2, kind: input, shape index: {}]
  %s3 = inlined_call_operand.hbm [shape: f32[2,256], index: 3, kind: output, shape index: {}]
  %s4 = sld [smem:[#allocation0]]
  $region26: #{tpu_custom_call.1} parent=0
    _
  %s6 = ssub.s32 1, %s4
  %s7 = scalar_select 0, %s6, %s4
  $region1: #{tpu_custom_call.1} parent=0
    #allocation2 [shape = 'u8[1024]{0}', space=vmem, size = 0x400, scoped, tag = 'input window, operand 0, single buffered']
    #allocation3 [shape = 's32[1]{0}', space=sflag, size = 0x4, scoped, tag = 'scoped memory for tpu_custom_call.1']
    #allocation4 [shape = 's32[1]{0}', space=sflag, size = 0x4, scoped, tag = 'scoped memory for tpu_custom_call.1']
    #allocation5 [shape = 'u8[2048]{0}', space=vmem, size = 0x800, scoped, tag = 'output window, operand 0, single buffered']
    %8 = vsyncpa [#allocation3], 0
    %9 = vsyncpa [#allocation4], 0
    // Predicated region
    $region2: #{tpu_custom_call.1} parent=1 // pred_check
      _
    $region3: #{tpu_custom_call.1} parent=1 // pred_check_branch
      %11 = sbr.rel (0) target = $region5
    $region4: #{tpu_custom_call.1} parent=1 // pred_region
      %s13 = ssub.s32 32, 32
      %14 = vsyncadd [#allocation3], %s13
      %s16 = sshll.u32 [#allocation2], 4
      %s17 = int_to_ptr.vmem [resolvable:$true] %s16
      %19 = dma.hbm_to_vmem [thread:$0]  %s0, 32, %s17, [#allocation3]
    $region5: #{tpu_custom_call.1} parent=1 // pred_fallthru
      _
    // Predicated region
    $region6: #{tpu_custom_call.1} parent=1 // pred_check
      _
    $region7: #{tpu_custom_call.1} parent=1 // pred_check_branch
      %21 = sbr.rel (0) target = $region9
    $region8: #{tpu_custom_call.1} parent=1 // pred_region
      _
    $region9: #{tpu_custom_call.1} parent=1 // pred_fallthru
      _
    // Predicated region
    $region10: #{tpu_custom_call.1} parent=1 // pred_check
      _
    $region11: #{tpu_custom_call.1} parent=1 // pred_check_branch
      %23 = sbr.rel (0) target = $region13
    $region12: #{tpu_custom_call.1} parent=1 // pred_region
      _
    $region13: #{tpu_custom_call.1} parent=1 // pred_fallthru
      _
    // Predicated region
    $region14: #{tpu_custom_call.1} parent=1 // pred_check
      _
    $region15: #{tpu_custom_call.1} parent=1 // pred_check_branch
      %25 = sbr.rel (0) target = $region17
    $region16: #{tpu_custom_call.1} parent=1 // pred_region
      %26 = dma.done [#allocation3], 32
    $region17: #{tpu_custom_call.1} parent=1 // pred_fallthru
      _
    %v28 = vld [vmem:[#allocation2] sm:$0x3]
    %v29 = vpack.c.bf16 %v28, %v28
    %v30 = vunpack.c.l.bf16 %v29
    %v31 = vsub.f32 %v28, %v30
    %v32 = vpack.c.bf16 %v31, %v31
    %v33 = vunpack.c.l.bf16 %v32
    %v34 = vsub.f32 %v31, %v33
    %v35 = vpack.c.bf16 %v34, %v34
    %v36 = vunpack.c.l.bf16 %v35
    %38 = vrot.lane.b32.xlu0 %v33, 8
    %v39 = vpop.permute.xlu0 %38
    %42 = vrot.lane.b32.xlu0 %v36, 16
    %v43 = vpop.permute.xlu0 %42
    %vm45 = vcmask 64512
    %v46 = vsel %vm45, %v30, %v39
    %vm47 = vcmask 130048
    %v48 = vsel %vm47, %v46, %v43
    %v49 = vpack.c.bf16 %v48, %v48
    %v50 = vlaneseq
    %v51 = vshrl.u32 %v50, 7
    %v52 = vadd.s32 %v51, 8
    %v53 = vadd.s32 %v51, 16
    %v54 = vlaneseq
    %v55 = vand.u32 %v54, 127
    %v56 = vadd.s32 %v55, 128
    %s57 = smul.u32 0, 256
    %v58 = vstv %s57
    %v59 = vadd.s32 %v55, %v58
    %v60 = vadd.s32 %v56, %v58
    %vm61 = vcmp.ge.s32.totalorder %v51, 8
    %vm62 = vcmp.ge.s32.totalorder %v52, 8
    %vm63 = vcmp.ge.s32.totalorder %v53, 8
    %v64 = vsel %vm61, 8, 0
    %v65 = vsel %vm62, 8, 0
    %v66 = vsel %vm63, 8, 0
    %v67 = vsub.s32 %v51, %v64
    %v68 = vsub.s32 %v52, %v65
    %v69 = vsub.s32 %v53, %v66
    %vm70 = vcmp.ge.s32.totalorder %v51, 16
    %vm71 = vcmp.ge.s32.totalorder %v52, 16
    %vm72 = vcmp.ge.s32.totalorder %v53, 16
    %v73 = vsel %vm70, 8, 0
    %v74 = vsel %vm71, 8, 0
    %v75 = vsel %vm72, 8, 0
    %v76 = vsub.s32 %v67, %v73
    %v77 = vsub.s32 %v68, %v74
    %v78 = vsub.s32 %v69, %v75
    %v79 = vmul.u32 %v76, 32
    %v80 = vmul.u32 %v77, 32
    %v81 = vmul.u32 %v78, 32
    %vm82 = vcmp.le.s32.totalorder %v79, %v59
    %vm83 = vcmp.le.s32.totalorder %v79, %v60
    %vm84 = vcmp.le.s32.totalorder %v80, %v59
    %vm85 = vcmp.le.s32.totalorder %v80, %v60
    %vm86 = vcmp.le.s32.totalorder %v81, %v59
    %vm87 = vcmp.le.s32.totalorder %v81, %v60
    %v88 = vadd.s32 %v79, 32
    %v89 = vadd.s32 %v80, 32
    %v90 = vadd.s32 %v81, 32
    %vm91 = vcmp.lt.s32.totalorder %v59, %v88
    %vm92 = vcmp.lt.s32.totalorder %v60, %v88
    %vm93 = vcmp.lt.s32.totalorder %v59, %v89
    %vm94 = vcmp.lt.s32.totalorder %v60, %v89
    %vm95 = vcmp.lt.s32.totalorder %v59, %v90
    %vm96 = vcmp.lt.s32.totalorder %v60, %v90
    %vm97 = vmand %vm82, %vm91
    %vm98 = vmand %vm83, %vm92
    %vm99 = vmand %vm84, %vm93
    %vm100 = vmand %vm85, %vm94
    %vm101 = vmand %vm86, %vm95
    %vm102 = vmand %vm87, %vm96
    %v103 = vsel %vm97, 1, 0
    %v104 = vsel %vm98, 1, 0
    %v105 = vsel %vm99, 1, 0
    %v106 = vsel %vm100, 1, 0
    %v107 = vsel %vm101, 1, 0
    %v108 = vsel %vm102, 1, 0
    %v109 = vcvt.s32.f32 %v103
    %v110 = vcvt.s32.f32 %v104
    %v111 = vcvt.s32.f32 %v105
    %v112 = vcvt.s32.f32 %v106
    %v113 = vcvt.s32.f32 %v107
    %v114 = vcvt.s32.f32 %v108
    %v115 = vpack.c.bf16 %v111, %v109
    %v116 = vpack.c.bf16 %v112, %v110
    %v117 = vpack.c.bf16 %v113, %v113
    %v118 = vpack.c.bf16 %v114, %v114
    %vm119 = vcmask 195584
    %v121 = vsel %vm119, %v49, 0
    %vm123 = vcmask 1043456
    %v125 = vsel %vm123, %v117, 0
    %v128 = vsel %vm123, %v118, 0
    %130 = vmatprep.subr.bf16.mxu0 %v116
    %131 = vmatpush1.bf16.msra.mxu0 %v115
    %132 = vmatprep.subr.bf16.mxu0 %v128
    %133 = vmatpush1.bf16.msra.mxu0 %v125
    %134 = vmatprep.subr.bf16.mxu0 0
    %135 = vmatpush1.bf16.msra.mxu0 0
    %136 = vmatprep.subr.bf16.mxu0 0
    %137 = vmatpush1.bf16.msra.mxu0 0
    %138 = vmatprep.subr.bf16.mxu0 0
    %139 = vmatpush1.bf16.msra.mxu0 0
    %140 = vmatprep.subr.bf16.mxu0 0
    %141 = vmatpush1.bf16.msra.mxu0 0
    %142 = vmatprep.subr.bf16.mxu0 0
    %143 = vmatpush1.bf16.msra.mxu0 0
    %144 = vmatprep.subr.bf16.mxu0 0
    %145 = vmatpush1.bf16.msra.mxu0 0
    %146 = vmatprep.subr.bf16.mxu0 0
    %147 = vmatpush1.bf16.msra.mxu0 0
    %148 = vmatprep.subr.bf16.mxu0 0
    %149 = vmatpush1.bf16.msra.mxu0 0
    %150 = vmatprep.subr.bf16.mxu0 0
    %151 = vmatpush1.bf16.msra.mxu0 0
    %152 = vmatprep.subr.bf16.mxu0 0
    %153 = vmatpush1.bf16.msra.mxu0 0
    %154 = vmatprep.subr.bf16.mxu0 0
    %155 = vmatpush1.bf16.msra.mxu0 0
    %156 = vmatprep.subr.bf16.mxu0 0
    %157 = vmatpush1.bf16.msra.mxu0 0
    %158 = vmatprep.subr.bf16.mxu0 0
    %159 = vmatpush1.bf16.msra.mxu0 0
    %160 = vmatprep.subr.bf16.mxu0 0
    %161 = vmatpush1.bf16.msra.mxu0 0
    %162 = vmatprep.mubr.bf16.mxu0 0
    %163 = vmatmul.mubr.bf16.gmra.mrb[0].mxu0 %v121
    %v164 = vpop.f32.mrb[0].mxu0
    %v165 = vadd.f32 0.0, %v164
    %v166 = vpop.f32.mrb[0].mxu0
    %v167 = vadd.f32 0.0, %v166
    %v168 = vpop.f32.mrb[0].mxu0
    %v169 = vpop.f32.mrb[0].mxu0
    %170 = vdwg.mxu0
    %v171 = vld [vmem:[%s1] sm:$0x3]
    %v173 = vlaneseq
    %v174 = vshrl.u32 %v173, 7
    %v175 = vsub.s32 0, %v174
    %v176 = vrot.slane %v171, %v175
    %v177 = vlaneseq
    %v178 = vshrl.u32 %v177, 7
    %v179 = vsub.s32 1, %v178
    %v180 = vrot.slane %v171, %v179
    %v183 = vmul.f32 %v165, %v176
    %v184 = vmul.f32 %v167, %v180
    %v185 = vld [vmem:[%s2] sm:$0x3]
    %v187 = vlaneseq
    %v188 = vshrl.u32 %v187, 7
    %v189 = vsub.s32 0, %v188
    %v190 = vrot.slane %v185, %v189
    %v191 = vlaneseq
    %v192 = vshrl.u32 %v191, 7
    %v193 = vsub.s32 1, %v192
    %v194 = vrot.slane %v185, %v193
    %v197 = vadd.f32 %v183, %v190
    %v198 = vadd.f32 %v184, %v194
    %v201 = vcombine.low %v197, %v198
    %v203 = vunpack.c.l.s4 1983009808
    %v204 = vunpack.c.0.s8 %v203
    %v205 = vlaneseq
    %v206 = vshrl.u32 %v205, 7
    %v207 = vsub.s32 %v204, %v206
    %v208 = vrot.slane %v201, %v207
    %210 = vst [vmem:[#allocation5] sm:$0xf] %v208
    // Predicated region
    $region18: #{tpu_custom_call.1} parent=1 // pred_check
      _
    $region19: #{tpu_custom_call.1} parent=1 // pred_check_branch
      %212 = sbr.rel (0) target = $region21
    $region20: #{tpu_custom_call.1} parent=1 // pred_region
      %s214 = ssub.s32 64, 64
      %215 = vsyncadd [#allocation4], %s214
      %s217 = sshll.u32 [#allocation5], 4
      %s218 = int_to_ptr.vmem [resolvable:$true] %s217
      %220 = dma.vmem_to_hbm [thread:$0]  %s218, 64, %s3, [#allocation4]
    $region21: #{tpu_custom_call.1} parent=1 // pred_fallthru
      _
    // Predicated region
    $region22: #{tpu_custom_call.1} parent=1 // pred_check
      _
    $region23: #{tpu_custom_call.1} parent=1 // pred_check_branch
      %222 = sbr.rel (0) target = $region25
    $region24: #{tpu_custom_call.1} parent=1 // pred_region
      %223 = dma.done [#allocation4], 64
    $region25: #{tpu_custom_call.1} parent=1 // pred_fallthru
      _
    %224 = vsyncpa [#allocation3], 1
    %225 = vsyncpa [#allocation4], 1

</llo_original>
